<compile_context>
chip_gen: v7x
topology: tpu7x:2x2x1
jax: 0.10.0
libtpu: 0.0.40
codegen_flags: <defaults>
</compile_context>

<pallas_src>
import jax
import jax.numpy as jnp
from jax.experimental import pallas as pl
from jax.experimental.pallas import tpu as pltpu


def _activity_kernel(x_ref, y_ref, amax_ref, rsum_ref):
    x = x_ref[...]                       # (TM, HW) float32
    y = y_ref[...]                       # (TM, HW) float32
    tm, hw = x.shape

    # --- argmax over the flattened spatial axis (first occurrence, like torch) ---
    # (1, HW) iota broadcast against the tile keeps int32 vreg pressure low.
    lane_idx = jax.lax.broadcasted_iota(jnp.int32, (1, hw), 1)
    row_max = jnp.max(x, axis=-1, keepdims=True)                 # (TM, 1)
    cand = jnp.where(x == row_max, lane_idx, jnp.int32(hw))      # (TM, HW)
    amax_ref[...] = jnp.min(cand, axis=-1)[None, :]              # (1, TM) int32

    # --- per-row partial L1 sums (global mean is finalized in the wrapper) ---
    rsum_ref[...] = jnp.sum(jnp.abs(x - y), axis=-1)[None, :]    # (1, TM) float32


def _choose_tm(bc, hw):
    """Rows per tile: target ~2 MiB per input block.

    Lane-dense (1, TM) outputs require TM % 128 == 0 whenever more than one
    tile is used; with a single tile the block simply equals the full array.
    """
    target_bytes = 2 << 20
    rows = max(1, target_bytes // (hw * 4))
    if rows >= bc:
        return bc                         # single tile, block == full array
    return max(128, (rows // 128) * 128)  # multi-tile: lane-dense alignment


def _run_kernel(x2d, y2d):
    bc, hw = x2d.shape                    # original (unpadded) extents
    tm = _choose_tm(bc, hw)
    num_tiles = pl.cdiv(bc, tm)
    bc_pad = num_tiles * tm
    if bc_pad != bc:
        pad = bc_pad - bc
        # zero-pad both inputs: padded rows contribute 0 to |x - y| sums.
        x2d = jnp.pad(x2d, ((0, pad), (0, 0)))
        y2d = jnp.pad(y2d, ((0, pad), (0, 0)))

    cost = pl.CostEstimate(
        flops=5 * bc_pad * hw,            # abs/sub/sum/max/select, roughly
        transcendentals=0,
        bytes_accessed=2 * bc_pad * hw * 4 + bc_pad * 8,
    )

    amax, row_sums = pl.pallas_call(
        _activity_kernel,
        grid=(num_tiles,),
        in_specs=[
            pl.BlockSpec((tm, hw), lambda i: (i, 0)),
            pl.BlockSpec((tm, hw), lambda i: (i, 0)),
        ],
        out_specs=(
            pl.BlockSpec((1, tm), lambda i: (0, i)),   # lane-dense argmax slab
            pl.BlockSpec((1, tm), lambda i: (0, i)),   # lane-dense row-sum slab
        ),
        out_shape=(
            jax.ShapeDtypeStruct((1, bc_pad), jnp.int32),
            jax.ShapeDtypeStruct((1, bc_pad), jnp.float32),
        ),
        compiler_params=pltpu.CompilerParams(
            dimension_semantics=("parallel",),         # megacore-shardable
            vmem_limit_bytes=48 * 1024 * 1024,
        ),
        cost_estimate=cost,
    )(x2d, y2d)

    maxes = amax[0, :bc]                                # drop padded rows
    # Padded rows contributed exactly 0; divide once by the GLOBAL element count.
    loss = jnp.sum(row_sums) / jnp.float32(bc * hw)
    return maxes, loss


class PixelActivityToCoordinate:
    def __init__(self, resolution):
        self.resolution = tuple(int(r) for r in resolution)

    def image_to_normalized(self, coordinate):
        # torch: int / int-tensor -> float true division
        res = jnp.asarray(self.resolution, dtype=jnp.float32)
        return (coordinate * 2 + 1).astype(jnp.float32) / res - 1.0

    def __call__(self, x, _, y_im):
        n, c, h, w = x.shape
        x2d = x.reshape(n * c, h * w)
        y2d = y_im.reshape(n * c, h * w)
        maxes, loss = _run_kernel(x2d, y2d)             # (N*C,) int32, scalar f32
        maxes = maxes.reshape(n, c)
        rows = maxes % self.resolution[0]
        columns = maxes // self.resolution[0]
        co_pixel = jnp.concatenate((rows, columns), axis=-1)   # (N, 2*C)
        co = self.image_to_normalized(co_pixel)
        return co, loss


def _check(B, C, H, W, key, loss_rtol):
    k1, k2 = jax.random.split(key)
    x = jax.random.normal(k1, (B, C, H, W), dtype=jnp.float32)
    y_im = jax.random.normal(k2, (B, C, H, W), dtype=jnp.float32)

    module = PixelActivityToCoordinate(resolution=(H, W))
    co, loss = module(x, None, y_im)
    co, loss = jax.block_until_ready((co, loss))

    # pure-JAX reference (mirrors the PyTorch module's own conventions)
    ref_maxes = jnp.argmax(x.reshape(B * C, H * W), axis=-1).reshape(B, C)
    ref_rows = ref_maxes % H
    ref_cols = ref_maxes // H
    ref_pix = jnp.concatenate((ref_rows, ref_cols), axis=-1)
    ref_co = (ref_pix * 2 + 1).astype(jnp.float32) / jnp.asarray((H, W), jnp.float32) - 1.0
    ref_loss = jnp.mean(jnp.abs(x - y_im))

    assert co.shape == (B, 2 * C) and co.dtype == jnp.float32
    assert loss.dtype == jnp.float32
    assert jnp.allclose(co, ref_co, atol=1e-5)
    assert jnp.allclose(loss, ref_loss, rtol=loss_rtol, atol=1e-5)


if __name__ == "__main__":
    key = jax.random.PRNGKey(0)
    k1, k2 = jax.random.split(key)

    # Small shape (single-tile path). C=1, as the module's broadcast of
    # resolution (len 2) against cat(rows, cols) of width 2*C implies.
    _check(2, 1, 16, 16, k1, loss_rtol=1e-5)

    # Moderately larger shape exercising the multi-tile + row-padding path
    # (BC=144 rows -> TM=128, two grid steps, 112 padded rows).
    _check(144, 1, 64, 64, k2, loss_rtol=5e-4)

    print("KERNEL_OK")
</pallas_src>

<mosaic_0001>
module attributes {stable_mosaic.version = 11 : i64} {
  func.func @_activity_kernel(%arg0: i32, %arg1: memref<2x256xf32, #tpu.memory_space<vmem>>, %arg2: memref<2x256xf32, #tpu.memory_space<vmem>>, %arg3: memref<1x2xi32, #tpu.memory_space<vmem>>, %arg4: memref<1x2xf32, #tpu.memory_space<vmem>>) attributes {dimension_semantics = [#tpu.dimension_semantics<parallel>], iteration_bounds = array<i64: 1>, scalar_prefetch = 0 : i64, scratch_operands = 0 : i64, tpu.core_type = #tpu.core_type<tc>, window_params = [{transform_indices = @transform_0, window_bounds = array<i64: 2, 256>}, {transform_indices = @transform_1, window_bounds = array<i64: 2, 256>}, {transform_indices = @transform_2, window_bounds = array<i64: 1, 2>}, {transform_indices = @transform_3, window_bounds = array<i64: 1, 2>}]} {
    %c0 = arith.constant 0 : index
    %c0_0 = arith.constant 0 : index
    %0 = vector.load %arg1[%c0, %c0_0] : memref<2x256xf32, #tpu.memory_space<vmem>>, vector<2x256xf32>
    %c0_1 = arith.constant 0 : index
    %c0_2 = arith.constant 0 : index
    %1 = vector.load %arg2[%c0_1, %c0_2] : memref<2x256xf32, #tpu.memory_space<vmem>>, vector<2x256xf32>
    %2 = tpu.iota {dimensions = array<i32: 1>} : vector<1x256xi32>
    %cst = arith.constant dense<0xFF800000> : vector<2xf32>
    %3 = vector.multi_reduction <maximumf>, %0, %cst [1] : vector<2x256xf32> to vector<2xf32>
    %4 = vector.shape_cast %3 : vector<2xf32> to vector<2x1xf32>
    %5 = vector.broadcast %4 : vector<2x1xf32> to vector<2x256xf32>
    %6 = arith.cmpf oeq, %0, %5 : vector<2x256xf32>
    %c256_i32 = arith.constant 256 : i32
    %7 = vector.shape_cast %2 : vector<1x256xi32> to vector<1x256xi32>
    %8 = vector.broadcast %7 : vector<1x256xi32> to vector<2x256xi32>
    %9 = vector.broadcast %c256_i32 : i32 to vector<2x256xi32>
    %10 = arith.select %6, %8, %9 : vector<2x256xi1>, vector<2x256xi32>
    %cst_3 = arith.constant dense<2147483647> : vector<2xi32>
    %11 = vector.multi_reduction <minsi>, %10, %cst_3 [1] : vector<2x256xi32> to vector<2xi32>
    %12 = vector.shape_cast %11 : vector<2xi32> to vector<1x2xi32>
    %c0_4 = arith.constant 0 : index
    %c0_5 = arith.constant 0 : index
    %13 = vector.load %arg3[%c0_4, %c0_5] : memref<1x2xi32, #tpu.memory_space<vmem>>, vector<1x2xi32>
    tpu.vector_store %arg3[%c0_4, %c0_5], %12 {strides = array<i32>} : memref<1x2xi32, #tpu.memory_space<vmem>>, vector<1x2xi32>,
    %14 = arith.subf %0, %1 : vector<2x256xf32>
    %15 = math.absf %14 : vector<2x256xf32>
    %cst_6 = arith.constant dense<0.000000e+00> : vector<2xf32>
    %16 = vector.multi_reduction <add>, %15, %cst_6 [1] : vector<2x256xf32> to vector<2xf32>
    %17 = vector.shape_cast %16 : vector<2xf32> to vector<1x2xf32>
    %c0_7 = arith.constant 0 : index
    %c0_8 = arith.constant 0 : index
    %18 = vector.load %arg4[%c0_7, %c0_8] : memref<1x2xf32, #tpu.memory_space<vmem>>, vector<1x2xf32>
    tpu.vector_store %arg4[%c0_7, %c0_8], %17 {strides = array<i32>} : memref<1x2xf32, #tpu.memory_space<vmem>>, vector<1x2xf32>,
    return
  }
  func.func @transform_0(%arg0: i32) -> (i32, i32) {
    %c0_i32 = arith.constant 0 : i32
    %c0_i32_0 = arith.constant 0 : i32
    return %arg0, %c0_i32 : i32, i32
  }
  func.func @transform_1(%arg0: i32) -> (i32, i32) {
    %c0_i32 = arith.constant 0 : i32
    %c0_i32_0 = arith.constant 0 : i32
    return %arg0, %c0_i32 : i32, i32
  }
  func.func @transform_2(%arg0: i32) -> (i32, i32) {
    %c0_i32 = arith.constant 0 : i32
    %c0_i32_0 = arith.constant 0 : i32
    return %c0_i32, %arg0 : i32, i32
  }
  func.func @transform_3(%arg0: i32) -> (i32, i32) {
    %c0_i32 = arith.constant 0 : i32
    %c0_i32_0 = arith.constant 0 : i32
    return %c0_i32, %arg0 : i32, i32
  }
}

</mosaic_0001>

<llo_original>
// kernel: tpu_custom_call.1
$region0: #{tpu_custom_call.1}
  #allocation0 [shape = 'u32[]', space=smem, size = 0x4, offset = 0x4, fixed_abs, tag = 'smem constant byte address 0x4 - core index']
  #allocation1 [shape = 'u32[144,128]{1,0:T(1,128)}', space=vmem, size = 0x12000, scoped, tag = 'internal scratch']
  %s0 = inlined_call_operand.hbm [shape: f32[2,256], index: 0, kind: input, shape index: {}]
  %s1 = inlined_call_operand.hbm [shape: f32[2,256], index: 1, kind: input, shape index: {}]
  %s2 = inlined_call_operand.hbm [shape: s32[1,2], index: 2, kind: output, shape index: {0}]
  %s3 = inlined_call_operand.hbm [shape: f32[1,2], index: 3, kind: output, shape index: {1}]
  %4 = xla_tuple %s2, %s3
  %s5 = sld [smem:[#allocation0]]
  $region34: #{tpu_custom_call.1} parent=0
    _
  %s7 = ssub.s32 1, %s5
  %s8 = scalar_select 0, %s7, %s5
  $region1: #{tpu_custom_call.1} parent=0
    #allocation2 [shape = 'u8[2048]{0}', space=vmem, size = 0x800, scoped, tag = 'input window, operand 0, single buffered']
    #allocation3 [shape = 's32[1]{0}', space=sflag, size = 0x4, scoped, tag = 'scoped memory for tpu_custom_call.1']
    #allocation4 [shape = 's32[1]{0}', space=sflag, size = 0x4, scoped, tag = 'scoped memory for tpu_custom_call.1']
    #allocation5 [shape = 'u8[2048]{0}', space=vmem, size = 0x800, scoped, tag = 'input window, operand 1, single buffered']
    #allocation6 [shape = 's32[1]{0}', space=sflag, size = 0x4, scoped, tag = 'scoped memory for tpu_custom_call.1']
    #allocation7 [shape = 'u8[512]{0}', space=vmem, size = 0x400, scoped, tag = 'output window, operand 0, single buffered']
    #allocation8 [shape = 'u8[512]{0}', space=vmem, size = 0x400, scoped, tag = 'output window, operand 1, single buffered']
    #allocation9 [shape = 's32[1]{0}', space=sflag, size = 0x4, scoped, tag = 'scoped memory for tpu_custom_call.1']
    %9 = vsyncpa [#allocation3], 0
    %10 = vsyncpa [#allocation6], 0
    %11 = vsyncpa [#allocation4], 0
    %12 = vsyncpa [#allocation9], 0
    // Predicated region
    $region2: #{tpu_custom_call.1} parent=1 // pred_check
      _
    $region3: #{tpu_custom_call.1} parent=1 // pred_check_branch
      %14 = sbr.rel (0) target = $region5
    $region4: #{tpu_custom_call.1} parent=1 // pred_region
      %s16 = ssub.s32 64, 64
      %17 = vsyncadd [#allocation3], %s16
      %s19 = sshll.u32 [#allocation2], 4
      %s20 = int_to_ptr.vmem [resolvable:$true] %s19
      %22 = dma.hbm_to_vmem [thread:$0]  %s0, 64, %s20, [#allocation3]
    $region5: #{tpu_custom_call.1} parent=1 // pred_fallthru
      _
    // Predicated region
    $region6: #{tpu_custom_call.1} parent=1 // pred_check
      _
    $region7: #{tpu_custom_call.1} parent=1 // pred_check_branch
      %24 = sbr.rel (0) target = $region9
    $region8: #{tpu_custom_call.1} parent=1 // pred_region
      %s26 = ssub.s32 64, 64
      %27 = vsyncadd [#allocation6], %s26
      %s29 = sshll.u32 [#allocation5], 4
      %s30 = int_to_ptr.vmem [resolvable:$true] %s29
      %32 = dma.hbm_to_vmem [thread:$0]  %s1, 64, %s30, [#allocation6]
    $region9: #{tpu_custom_call.1} parent=1 // pred_fallthru
      _
    // Predicated region
    $region10: #{tpu_custom_call.1} parent=1 // pred_check
      _
    $region11: #{tpu_custom_call.1} parent=1 // pred_check_branch
      %34 = sbr.rel (0) target = $region13
    $region12: #{tpu_custom_call.1} parent=1 // pred_region
      %35 = dma.done [#allocation3], 64
    $region13: #{tpu_custom_call.1} parent=1 // pred_fallthru
      _
    // Predicated region
    $region14: #{tpu_custom_call.1} parent=1 // pred_check
      _
    $region15: #{tpu_custom_call.1} parent=1 // pred_check_branch
      %37 = sbr.rel (0) target = $region17
    $region16: #{tpu_custom_call.1} parent=1 // pred_region
      %38 = dma.done [#allocation6], 64
    $region17: #{tpu_custom_call.1} parent=1 // pred_fallthru
      _
    %v39 = vld [vmem:[#allocation2] sm:$0xf]
    %v40 = vld [vmem:[#allocation5] sm:$0xf]
    %v41 = vlaneseq
    %v42 = vand.u32 %v41, 127
    %v43 = vadd.s32 %v42, 128
    %v46 = vunpack.c.l.s4 1983009808
    %v47 = vunpack.c.0.s8 %v46
    %v48 = vlaneseq
    %v49 = vshrl.u32 %v48, 7
    %v50 = vsub.s32 %v47, %v49
    %v51 = vrot.slane %v39, %v50
    %v52 = vcombine.high %v51, %v51
    %vm55 = vcmask 1041408
    %v56 = vsel %vm55, %v51, -inf
    %v57 = vsel %vm55, %v52, -inf
    %v58 = vmax.f32 %v56, %v57
    %59 = vmax.xlane.f32.xlu0 %v58
    %v60 = vpop.xlane.xlu0 %59
    %v63 = vunpack.c.l.s4 269488144
    %v64 = vunpack.c.0.s8 %v63
    %v65 = vlaneseq
    %v66 = vshrl.u32 %v65, 7
    %v67 = vsub.s32 %v64, %v66
    %v68 = vrot.slane %v60, %v67
    %vm70 = vcmp.eq.f32.partialorder %v39, %v68
    %v71 = vcombine.low %v42, %v43
    %v73 = vunpack.c.l.s4 1983009808
    %v74 = vunpack.c.0.s8 %v73
    %v75 = vlaneseq
    %v76 = vshrl.u32 %v75, 7
    %v77 = vsub.s32 %v74, %v76
    %v78 = vrot.slane %v71, %v77
    %v79 = vsel %vm70, %v78, 256
    %v81 = vunpack.c.l.s4 1983009808
    %v82 = vunpack.c.0.s8 %v81
    %v83 = vlaneseq
    %v84 = vshrl.u32 %v83, 7
    %v85 = vsub.s32 %v82, %v84
    %v86 = vrot.slane %v79, %v85
    %v87 = vcombine.high %v86, %v86
    %v88 = vsel %vm55, %v86, 2147483647
    %v89 = vsel %vm55, %v87, 2147483647
    %vm90 = vcmp.lt.s32.totalorder %v88, %v89
    %v91 = vsel %vm90, %v88, %v89
    %v92 = vand.u32 %v91, 65535
    %v93 = vshra.s32 %v91, 16
    %v94 = vcvt.s32.f32 %v92
    %v95 = vcvt.s32.f32 %v93
    %96 = vmin.xlane.f32.xlu0 %v95
    %v97 = vpop.xlane.xlu0 %96
    %vm98 = vcmp.eq.f32.partialorder %v95, %v97
    %v99 = vsel %vm98, %v94, inf
    %100 = vmin.xlane.f32.xlu0 %v99
    %v101 = vpop.xlane.xlu0 %100
    %v102 = vcvt.f32.s32 %v101
    %v103 = vcvt.f32.s32 %v97
    %v104 = vshll.u32 %v103, 16
    %v105 = vadd.s32 %v104, %v102
    %v106 = vlaneseq
    %v107 = vshrl.u32 %v106, 7
    %v108 = vsub.s32 %v42, %v107
    %v109 = vrot.slane %v105, %v108
    %vm110 = vcmask 8192
    %111 = vst.msk [vmem:[#allocation7] sm:$0x1] %vm110, %v109
    %v112 = vsub.f32 %v39, %v40
    %v113 = vand.u32 2147483647, %v112
    %v116 = vunpack.c.l.s4 1983009808
    %v117 = vunpack.c.0.s8 %v116
    %v118 = vlaneseq
    %v119 = vshrl.u32 %v118, 7
    %v120 = vsub.s32 %v117, %v119
    %v121 = vrot.slane %v113, %v120
    %v122 = vcombine.high %v121, %v121
    %v125 = vsel %vm55, %v121, 0.0
    %v126 = vsel %vm55, %v122, 0.0
    %v127 = vadd.f32 %v125, %v126
    %128 = vadd.xlane.f32.xlu0 %v127
    %v129 = vpop.xlane.xlu0 %128
    %v131 = vlaneseq
    %v132 = vshrl.u32 %v131, 7
    %v133 = vsub.s32 %v42, %v132
    %v134 = vrot.slane %v129, %v133
    %136 = vst.msk [vmem:[#allocation8] sm:$0x1] %vm110, %v134
    // Predicated region
    $region18: #{tpu_custom_call.1} parent=1 // pred_check
      _
    $region19: #{tpu_custom_call.1} parent=1 // pred_check_branch
      %138 = sbr.rel (0) target = $region21
    $region20: #{tpu_custom_call.1} parent=1 // pred_region
      %s140 = ssub.s32 16, 16
      %141 = vsyncadd [#allocation4], %s140
      %s143 = sshll.u32 [#allocation7], 4
      %s144 = int_to_ptr.vmem [resolvable:$true] %s143
      %146 = dma.vmem_to_hbm [thread:$0]  %s144, 16, %s2, [#allocation4]
    $region21: #{tpu_custom_call.1} parent=1 // pred_fallthru
      _
    // Predicated region
    $region22: #{tpu_custom_call.1} parent=1 // pred_check
      _
    $region23: #{tpu_custom_call.1} parent=1 // pred_check_branch
      %148 = sbr.rel (0) target = $region25
    $region24: #{tpu_custom_call.1} parent=1 // pred_region
      %s150 = ssub.s32 16, 16
      %151 = vsyncadd [#allocation9], %s150
      %s153 = sshll.u32 [#allocation8], 4
      %s154 = int_to_ptr.vmem [resolvable:$true] %s153
      %156 = dma.vmem_to_hbm [thread:$0]  %s154, 16, %s3, [#allocation9]
    $region25: #{tpu_custom_call.1} parent=1 // pred_fallthru
      _
    // Predicated region
    $region26: #{tpu_custom_call.1} parent=1 // pred_check
      _
    $region27: #{tpu_custom_call.1} parent=1 // pred_check_branch
      %158 = sbr.rel (0) target = $region29
    $region28: #{tpu_custom_call.1} parent=1 // pred_region
      %159 = dma.done [#allocation4], 16
    $region29: #{tpu_custom_call.1} parent=1 // pred_fallthru
      _
    // Predicated region
    $region30: #{tpu_custom_call.1} parent=1 // pred_check
      _
    $region31: #{tpu_custom_call.1} parent=1 // pred_check_branch
      %161 = sbr.rel (0) target = $region33
    $region32: #{tpu_custom_call.1} parent=1 // pred_region
      %162 = dma.done [#allocation9], 16
    $region33: #{tpu_custom_call.1} parent=1 // pred_fallthru
      _
    %163 = vsyncpa [#allocation3], 1
    %164 = vsyncpa [#allocation6], 1
    %165 = vsyncpa [#allocation4], 1
    %166 = vsyncpa [#allocation9], 1

</llo_original>
